<compile_context>
chip_gen: v7x
topology: tpu7x:2x2x1
jax: 0.10.0
libtpu: 0.0.40
codegen_flags: <defaults>
</compile_context>

<pallas_src>
import jax
import jax.numpy as jnp
from jax.experimental import pallas as pl
from jax.experimental.pallas import tpu as pltpu


def _round_up(x, m):
    return (x + m - 1) // m * m


def safety_margin_kernel(x_ref, w1t_ref, b1t_ref, w2t_ref, b2t_ref,
                         w3t_ref, b3t_ref, o_ref):
    """One batch tile (TB columns). Batch on lanes, features on sublanes."""
    # Layer 1: (h1, input_dim) @ (input_dim, TB) -> (h1, TB). Single K=10 dot.
    h = (jnp.dot(w1t_ref[...], x_ref[...], preferred_element_type=jnp.float32)
         + b1t_ref[...])                         # (h1,1) bias broadcasts along lanes
    h = h * jax.nn.sigmoid(h)                    # SiLU, lane-dense

    # Layer 2: (h2, h1) @ (h1, TB) -> (h2, TB).
    h = (jnp.dot(w2t_ref[...], h, preferred_element_type=jnp.float32)
         + b2t_ref[...])
    h = h * jax.nn.sigmoid(h)                    # SiLU

    # Output layer: (1, h2) @ (h2, TB) -> (1, TB). Single MXU dot producing an
    # already lane-dense output row -> unmasked full-lane stores.
    out = (jnp.dot(w3t_ref[...], h, preferred_element_type=jnp.float32)
           + b3t_ref[...])
    o_ref[...] = out.astype(o_ref.dtype)


def safety_margin_forward(z, z_const, params, *, max_batch_tile=4096):
    """z: (B, d_z) f32, z_const: (B, d_zc) f32 -> (B, out_dim) f32."""
    B, d_z = z.shape
    _, d_zc = z_const.shape
    input_dim = d_z + d_zc

    w1t, b1t = params["w1_t"], params["b1_t"]
    w2t, b2t = params["w2_t"], params["b2_t"]
    w3t, b3t = params["w3_t"], params["b3_t"]
    h1 = w1t.shape[0]
    h2 = w2t.shape[0]
    out_dim = w3t.shape[0]

    # Batch tile: multiple of 128 (lane width). Large to amortize the
    # ~0.35 us per-grid-step overhead; still tiny in VMEM in this layout.
    TB = min(max_batch_tile, _round_up(B, 128))
    num_tiles = pl.cdiv(B, TB)
    B_pad = num_tiles * TB

    # Concatenate + transpose once outside the kernel (batch -> lanes), and
    # zero-pad the batch so every grid tile is full (no partial blocks).
    x_t = jnp.concatenate([z, z_const], axis=-1).T        # (input_dim, B)
    if B_pad != B:
        x_t = jnp.pad(x_t, ((0, 0), (0, B_pad - B)))

    cost = pl.CostEstimate(
        flops=2 * B_pad * (input_dim * h1 + h1 * h2 + h2 * out_dim),
        transcendentals=B_pad * (h1 + h2),
        bytes_accessed=4 * (B_pad * input_dim + B_pad * out_dim
                            + input_dim * h1 + h1 * h2 + h2 * out_dim
                            + h1 + h2 + out_dim),
    )

    out_t = pl.pallas_call(
        safety_margin_kernel,
        out_shape=jax.ShapeDtypeStruct((out_dim, B_pad), jnp.float32),
        grid=(num_tiles,),
        in_specs=[
            # Batch-tiled (lane-tiled) activations: pipelined & double-buffered.
            pl.BlockSpec((input_dim, TB), lambda i: (0, i)),
            # Weights / biases: full-array blocks with constant index maps
            # -> fetched once, VMEM-resident across all grid steps.
            pl.BlockSpec(w1t.shape, lambda i: (0, 0)),
            pl.BlockSpec(b1t.shape, lambda i: (0, 0)),
            pl.BlockSpec(w2t.shape, lambda i: (0, 0)),
            pl.BlockSpec(b2t.shape, lambda i: (0, 0)),
            pl.BlockSpec(w3t.shape, lambda i: (0, 0)),
            pl.BlockSpec(b3t.shape, lambda i: (0, 0)),
        ],
        # Lane-dense output row per tile.
        out_specs=pl.BlockSpec((out_dim, TB), lambda i: (0, i)),
        compiler_params=pltpu.CompilerParams(
            dimension_semantics=("parallel",),
        ),
        cost_estimate=cost,
    )(x_t, w1t, b1t, w2t, b2t, w3t, b3t)

    # (out_dim, B_pad) -> (B, out_dim)
    return out_t[:, :B].T


def init_params(key, d_z, d_zc, hidden_dims, output_dim):
    """nn.Linear-style init (uniform +/- 1/sqrt(fan_in)), pre-transposed for the kernel."""
    h1, h2 = hidden_dims
    input_dim = d_z + d_zc
    ks = jax.random.split(key, 6)

    def u(k, shape, fan_in):
        bound = 1.0 / jnp.sqrt(float(fan_in))
        return jax.random.uniform(k, shape, jnp.float32, -bound, bound)

    w1 = u(ks[0], (input_dim, h1), input_dim)   # (in, out) convention: x @ W
    b1 = u(ks[1], (h1,), input_dim)
    w2 = u(ks[2], (h1, h2), h1)
    b2 = u(ks[3], (h2,), h1)
    w3 = u(ks[4], (h2, output_dim), h2)
    b3 = u(ks[5], (output_dim,), h2)

    return {
        # Kernel-facing transposed layout (batch-on-lanes dataflow).
        "w1_t": w1.T,                          # (h1, input_dim)
        "b1_t": b1.reshape(h1, 1),             # broadcasts along lanes
        "w2_t": w2.T,                          # (h2, h1)
        "b2_t": b2.reshape(h2, 1),
        "w3_t": w3.T,                          # (out_dim, h2)
        "b3_t": b3.reshape(output_dim, 1),
        # Row-major forms for the pure-JAX reference.
        "w1": w1, "b1": b1, "w2": w2, "b2": b2, "w3": w3, "b3": b3,
    }


def reference_forward(z, z_const, params):
    """Pure-JAX reference matching the PyTorch module exactly."""
    x = jnp.concatenate([z, z_const], axis=-1)
    h = x @ params["w1"] + params["b1"]
    h = h * jax.nn.sigmoid(h)
    h = h @ params["w2"] + params["b2"]
    h = h * jax.nn.sigmoid(h)
    return h @ params["w3"] + params["b3"]


if __name__ == "__main__":
    input_dim = 10        # as in the PyTorch script
    output_dim = 1        # as in the PyTorch script
    hidden_dims = (32, 32)

    batch = 8
    d_z, d_zc = 6, 4      # d_z + d_zc == input_dim

    key = jax.random.PRNGKey(0)
    kz, kzc, kp = jax.random.split(key, 3)

    z = jax.random.normal(kz, (batch, d_z), jnp.float32)
    z_const = jax.random.normal(kzc, (batch, d_zc), jnp.float32)
    params = init_params(kp, d_z, d_zc, hidden_dims, output_dim)

    out = safety_margin_forward(z, z_const, params)
    out = jax.block_until_ready(out)

    ref = reference_forward(z, z_const, params)
    assert out.shape == (batch, output_dim)
    assert jnp.allclose(out, ref, atol=1e-4, rtol=1e-4), "mismatch vs reference"

    print("KERNEL_OK")
</pallas_src>

<mosaic_0001>
module attributes {stable_mosaic.version = 11 : i64} {
  func.func @safety_margin_kernel(%arg0: i32, %arg1: memref<10x128xf32, #tpu.memory_space<vmem>>, %arg2: memref<32x10xf32, #tpu.memory_space<vmem>>, %arg3: memref<32x1xf32, #tpu.memory_space<vmem>>, %arg4: memref<32x32xf32, #tpu.memory_space<vmem>>, %arg5: memref<32x1xf32, #tpu.memory_space<vmem>>, %arg6: memref<1x32xf32, #tpu.memory_space<vmem>>, %arg7: memref<1x1xf32, #tpu.memory_space<vmem>>, %arg8: memref<1x128xf32, #tpu.memory_space<vmem>>) attributes {dimension_semantics = [#tpu.dimension_semantics<parallel>], iteration_bounds = array<i64: 1>, scalar_prefetch = 0 : i64, scratch_operands = 0 : i64, tpu.core_type = #tpu.core_type<tc>, window_params = [{transform_indices = @transform_0, window_bounds = array<i64: 10, 128>}, {pipeline_mode = #tpu.pipeline_mode<synchronous>, transform_indices = @transform_1, window_bounds = array<i64: 32, 10>}, {pipeline_mode = #tpu.pipeline_mode<synchronous>, transform_indices = @transform_2, window_bounds = array<i64: 32, 1>}, {pipeline_mode = #tpu.pipeline_mode<synchronous>, transform_indices = @transform_3, window_bounds = array<i64: 32, 32>}, {pipeline_mode = #tpu.pipeline_mode<synchronous>, transform_indices = @transform_4, window_bounds = array<i64: 32, 1>}, {pipeline_mode = #tpu.pipeline_mode<synchronous>, transform_indices = @transform_5, window_bounds = array<i64: 1, 32>}, {pipeline_mode = #tpu.pipeline_mode<synchronous>, transform_indices = @transform_6, window_bounds = array<i64: 1, 1>}, {transform_indices = @transform_7, window_bounds = array<i64: 1, 128>}]} {
    %c0 = arith.constant 0 : index
    %c0_0 = arith.constant 0 : index
    %0 = vector.load %arg2[%c0, %c0_0] : memref<32x10xf32, #tpu.memory_space<vmem>>, vector<32x10xf32>
    %c0_1 = arith.constant 0 : index
    %c0_2 = arith.constant 0 : index
    %1 = vector.load %arg1[%c0_1, %c0_2] : memref<10x128xf32, #tpu.memory_space<vmem>>, vector<10x128xf32>
    %cst = arith.constant dense<0.000000e+00> : vector<32x128xf32>
    %2 = tpu.matmul %0, %1, %cst {dimension_numbers = #tpu.dot_dimension_numbers<[1], [0], [0], [1], [0, 0, 1, 1], [], []>} : vector<32x10xf32>, vector<10x128xf32>, vector<32x128xf32> -> vector<32x128xf32>
    %c0_3 = arith.constant 0 : index
    %c0_4 = arith.constant 0 : index
    %3 = vector.load %arg3[%c0_3, %c0_4] : memref<32x1xf32, #tpu.memory_space<vmem>>, vector<32x1xf32>
    %4 = vector.broadcast %3 : vector<32x1xf32> to vector<32x128xf32>
    %5 = arith.addf %2, %4 : vector<32x128xf32>
    %6 = arith.negf %5 : vector<32x128xf32>
    %7 = math.exp %6 : vector<32x128xf32>
    %cst_5 = arith.constant 1.000000e+00 : f32
    %8 = vector.broadcast %cst_5 : f32 to vector<32x128xf32>
    %9 = arith.addf %8, %7 : vector<32x128xf32>
    %10 = arith.divf %8, %9 : vector<32x128xf32>
    %11 = arith.mulf %5, %10 : vector<32x128xf32>
    %c0_6 = arith.constant 0 : index
    %c0_7 = arith.constant 0 : index
    %12 = vector.load %arg4[%c0_6, %c0_7] : memref<32x32xf32, #tpu.memory_space<vmem>>, vector<32x32xf32>
    %cst_8 = arith.constant dense<0.000000e+00> : vector<32x128xf32>
    %13 = tpu.matmul %12, %11, %cst_8 {dimension_numbers = #tpu.dot_dimension_numbers<[1], [0], [0], [1], [0, 0, 1, 1], [], []>} : vector<32x32xf32>, vector<32x128xf32>, vector<32x128xf32> -> vector<32x128xf32>
    %c0_9 = arith.constant 0 : index
    %c0_10 = arith.constant 0 : index
    %14 = vector.load %arg5[%c0_9, %c0_10] : memref<32x1xf32, #tpu.memory_space<vmem>>, vector<32x1xf32>
    %15 = vector.broadcast %14 : vector<32x1xf32> to vector<32x128xf32>
    %16 = arith.addf %13, %15 : vector<32x128xf32>
    %17 = arith.negf %16 : vector<32x128xf32>
    %18 = math.exp %17 : vector<32x128xf32>
    %cst_11 = arith.constant 1.000000e+00 : f32
    %19 = vector.broadcast %cst_11 : f32 to vector<32x128xf32>
    %20 = arith.addf %19, %18 : vector<32x128xf32>
    %21 = arith.divf %19, %20 : vector<32x128xf32>
    %22 = arith.mulf %16, %21 : vector<32x128xf32>
    %c0_12 = arith.constant 0 : index
    %c0_13 = arith.constant 0 : index
    %23 = vector.load %arg6[%c0_12, %c0_13] : memref<1x32xf32, #tpu.memory_space<vmem>>, vector<1x32xf32>
    %cst_14 = arith.constant dense<0.000000e+00> : vector<1x128xf32>
    %24 = tpu.matmul %23, %22, %cst_14 {dimension_numbers = #tpu.dot_dimension_numbers<[1], [0], [0], [1], [0, 0, 1, 1], [], []>} : vector<1x32xf32>, vector<32x128xf32>, vector<1x128xf32> -> vector<1x128xf32>
    %c0_15 = arith.constant 0 : index
    %c0_16 = arith.constant 0 : index
    %25 = vector.load %arg7[%c0_15, %c0_16] : memref<1x1xf32, #tpu.memory_space<vmem>>, vector<1x1xf32>
    %26 = vector.broadcast %25 : vector<1x1xf32> to vector<1x128xf32>
    %27 = arith.addf %24, %26 : vector<1x128xf32>
    %c0_17 = arith.constant 0 : index
    %c0_18 = arith.constant 0 : index
    %28 = vector.load %arg8[%c0_17, %c0_18] : memref<1x128xf32, #tpu.memory_space<vmem>>, vector<1x128xf32>
    tpu.vector_store %arg8[%c0_17, %c0_18], %27 {strides = array<i32>} : memref<1x128xf32, #tpu.memory_space<vmem>>, vector<1x128xf32>,
    return
  }
  func.func @transform_0(%arg0: i32) -> (i32, i32) {
    %c0_i32 = arith.constant 0 : i32
    %c0_i32_0 = arith.constant 0 : i32
    return %c0_i32, %arg0 : i32, i32
  }
  func.func @transform_1(%arg0: i32) -> (i32, i32) {
    %c0_i32 = arith.constant 0 : i32
    %c0_i32_0 = arith.constant 0 : i32
    %c0_i32_1 = arith.constant 0 : i32
    return %c0_i32, %c0_i32_0 : i32, i32
  }
  func.func @transform_2(%arg0: i32) -> (i32, i32) {
    %c0_i32 = arith.constant 0 : i32
    %c0_i32_0 = arith.constant 0 : i32
    %c0_i32_1 = arith.constant 0 : i32
    return %c0_i32, %c0_i32_0 : i32, i32
  }
  func.func @transform_3(%arg0: i32) -> (i32, i32) {
    %c0_i32 = arith.constant 0 : i32
    %c0_i32_0 = arith.constant 0 : i32
    %c0_i32_1 = arith.constant 0 : i32
    return %c0_i32, %c0_i32_0 : i32, i32
  }
  func.func @transform_4(%arg0: i32) -> (i32, i32) {
    %c0_i32 = arith.constant 0 : i32
    %c0_i32_0 = arith.constant 0 : i32
    %c0_i32_1 = arith.constant 0 : i32
    return %c0_i32, %c0_i32_0 : i32, i32
  }
  func.func @transform_5(%arg0: i32) -> (i32, i32) {
    %c0_i32 = arith.constant 0 : i32
    %c0_i32_0 = arith.constant 0 : i32
    %c0_i32_1 = arith.constant 0 : i32
    return %c0_i32, %c0_i32_0 : i32, i32
  }
  func.func @transform_6(%arg0: i32) -> (i32, i32) {
    %c0_i32 = arith.constant 0 : i32
    %c0_i32_0 = arith.constant 0 : i32
    %c0_i32_1 = arith.constant 0 : i32
    return %c0_i32, %c0_i32_0 : i32, i32
  }
  func.func @transform_7(%arg0: i32) -> (i32, i32) {
    %c0_i32 = arith.constant 0 : i32
    %c0_i32_0 = arith.constant 0 : i32
    return %c0_i32, %arg0 : i32, i32
  }
}

</mosaic_0001>

<llo_original>
// kernel: tpu_custom_call.1
$region0: #{tpu_custom_call.1}
  #allocation0 [shape = 'u32[]', space=smem, size = 0x4, offset = 0x4, fixed_abs, tag = 'smem constant byte address 0x4 - core index']
  #allocation1 [shape = 'u32[144,128]{1,0:T(1,128)}', space=vmem, size = 0x12000, scoped, tag = 'internal scratch']
  #allocation2 [shape = 'f32[1,1]{1,0:T(1,128)S(1)}', space=vmem, size = 0x200, scoped, tag = 'scoped memory for tpu_custom_call.1']
  %s0 = inlined_call_operand.vmem [shape: f32[10,128], index: 0, kind: input, shape index: {}]
  %s1 = inlined_call_operand.vmem [shape: f32[32,10], index: 1, kind: input, shape index: {}]
  %s2 = inlined_call_operand.vmem [shape: f32[32,1], index: 2, kind: input, shape index: {}]
  %s3 = inlined_call_operand.vmem [shape: f32[32,32], index: 3, kind: input, shape index: {}]
  %s4 = inlined_call_operand.vmem [shape: f32[32,1], index: 4, kind: input, shape index: {}]
  %s5 = inlined_call_operand.vmem [shape: f32[1,32], index: 5, kind: input, shape index: {}]
  %s6 = inlined_call_operand.<no memory space> [shape: f32[1,1], index: 6, kind: input, shape index: {}]
  %s7 = inlined_call_operand.hbm [shape: f32[1,128], index: 7, kind: output, shape index: {}]
  %s8 = sld [smem:[#allocation0]]
  $region38: #{tpu_custom_call.1} parent=0
    _
  %s10 = ssub.s32 1, %s8
  %s11 = scalar_select 0, %s10, %s8
  %v12 = vstv %s6
  %13 = vst [vmem:[#allocation2] sm:$0x1] %v12
  $region1: #{tpu_custom_call.1} parent=0
    #allocation3 [shape = 'u8[512]{0}', space=vmem, size = 0x400, scoped, tag = 'output window, operand 0, single buffered']
    #allocation4 [shape = 's32[1]{0}', space=sflag, size = 0x4, scoped, tag = 'scoped memory for tpu_custom_call.1']
    %14 = vsyncpa [#allocation4], 0
    // Predicated region
    $region2: #{tpu_custom_call.1} parent=1 // pred_check
      _
    $region3: #{tpu_custom_call.1} parent=1 // pred_check_branch
      %16 = sbr.rel (0) target = $region5
    $region4: #{tpu_custom_call.1} parent=1 // pred_region
      _
    $region5: #{tpu_custom_call.1} parent=1 // pred_fallthru
      _
    // Predicated region
    $region6: #{tpu_custom_call.1} parent=1 // pred_check
      _
    $region7: #{tpu_custom_call.1} parent=1 // pred_check_branch
      %18 = sbr.rel (0) target = $region9
    $region8: #{tpu_custom_call.1} parent=1 // pred_region
      _
    $region9: #{tpu_custom_call.1} parent=1 // pred_fallthru
      _
    // Predicated region
    $region10: #{tpu_custom_call.1} parent=1 // pred_check
      _
    $region11: #{tpu_custom_call.1} parent=1 // pred_check_branch
      %20 = sbr.rel (0) target = $region13
    $region12: #{tpu_custom_call.1} parent=1 // pred_region
      _
    $region13: #{tpu_custom_call.1} parent=1 // pred_fallthru
      _
    // Predicated region
    $region14: #{tpu_custom_call.1} parent=1 // pred_check
      _
    $region15: #{tpu_custom_call.1} parent=1 // pred_check_branch
      %22 = sbr.rel (0) target = $region17
    $region16: #{tpu_custom_call.1} parent=1 // pred_region
      _
    $region17: #{tpu_custom_call.1} parent=1 // pred_fallthru
      _
    // Predicated region
    $region18: #{tpu_custom_call.1} parent=1 // pred_check
      _
    $region19: #{tpu_custom_call.1} parent=1 // pred_check_branch
      %24 = sbr.rel (0) target = $region21
    $region20: #{tpu_custom_call.1} parent=1 // pred_region
      _
    $region21: #{tpu_custom_call.1} parent=1 // pred_fallthru
      _
    // Predicated region
    $region22: #{tpu_custom_call.1} parent=1 // pred_check
      _
    $region23: #{tpu_custom_call.1} parent=1 // pred_check_branch
      %26 = sbr.rel (0) target = $region25
    $region24: #{tpu_custom_call.1} parent=1 // pred_region
      _
    $region25: #{tpu_custom_call.1} parent=1 // pred_fallthru
      _
    // Predicated region
    $region26: #{tpu_custom_call.1} parent=1 // pred_check
      _
    $region27: #{tpu_custom_call.1} parent=1 // pred_check_branch
      %28 = sbr.rel (0) target = $region29
    $region28: #{tpu_custom_call.1} parent=1 // pred_region
      _
    $region29: #{tpu_custom_call.1} parent=1 // pred_fallthru
      _
    %v29 = vld [vmem:[%s1] sm:$0xff]
    %v30 = vld [vmem:[%s1 + $0x8] sm:$0xff]
    %v31 = vld [vmem:[%s1 + $0x10] sm:$0xff]
    %v32 = vld [vmem:[%s1 + $0x18] sm:$0xff]
    %v33 = vld [vmem:[%s0] sm:$0xff]
    %v34 = vld [vmem:[%s0 + $0x8] sm:$0x3]
    %v35 = vld [vmem:[%s2] sm:$0xff]
    %v36 = vld [vmem:[%s2 + $0x8] sm:$0xff]
    %v37 = vld [vmem:[%s2 + $0x10] sm:$0xff]
    %v38 = vld [vmem:[%s2 + $0x18] sm:$0xff]
    %40 = vset.pattern.permute.xlu0 0
    %41 = vperm.xlu0 %40, %v35
    %v42 = vpop.permute.xlu0 %41
    %45 = vset.pattern.permute.xlu0 0
    %46 = vperm.xlu0 %45, %v36
    %v47 = vpop.permute.xlu0 %46
    %50 = vset.pattern.permute.xlu0 0
    %51 = vperm.xlu0 %50, %v37
    %v52 = vpop.permute.xlu0 %51
    %55 = vset.pattern.permute.xlu0 0
    %56 = vperm.xlu0 %55, %v38
    %v57 = vpop.permute.xlu0 %56
    %vm59 = vcmask 80896
    %v61 = vsel %vm59, %v29, 0
    %v64 = vsel %vm59, %v30, 0
    %v67 = vsel %vm59, %v31, 0
    %v70 = vsel %vm59, %v32, 0
    %vm72 = vcmask 1041408
    %v74 = vsel %vm72, %v34, 0
    %76 = vmatprep.subr.mxu0 0.0
    %77 = vmatpush1.msra.mxu0 %v33
    %78 = vmatprep.subr.mxu0 0.0
    %79 = vmatpush1.msra.mxu0 %v74
    %80 = vmatprep.subr.mxu0 0.0
    %81 = vmatpush1.msra.mxu0 0.0
    %82 = vmatprep.subr.mxu0 0.0
    %83 = vmatpush1.msra.mxu0 0.0
    %84 = vmatprep.subr.mxu0 0.0
    %85 = vmatpush1.msra.mxu0 0.0
    %86 = vmatprep.subr.mxu0 0.0
    %87 = vmatpush1.msra.mxu0 0.0
    %88 = vmatprep.subr.mxu0 0.0
    %89 = vmatpush1.msra.mxu0 0.0
    %90 = vmatprep.subr.mxu0 0.0
    %91 = vmatpush1.msra.mxu0 0.0
    %92 = vmatprep.subr.mxu0 0.0
    %93 = vmatpush1.msra.mxu0 0.0
    %94 = vmatprep.subr.mxu0 0.0
    %95 = vmatpush1.msra.mxu0 0.0
    %96 = vmatprep.subr.mxu0 0.0
    %97 = vmatpush1.msra.mxu0 0.0
    %98 = vmatprep.subr.mxu0 0.0
    %99 = vmatpush1.msra.mxu0 0.0
    %100 = vmatprep.subr.mxu0 0.0
    %101 = vmatpush1.msra.mxu0 0.0
    %102 = vmatprep.subr.mxu0 0.0
    %103 = vmatpush1.msra.mxu0 0.0
    %104 = vmatprep.subr.mxu0 0.0
    %105 = vmatpush1.msra.mxu0 0.0
    %106 = vmatprep.subr.mxu0 0.0
    %107 = vmatpush1.msra.mxu0 0.0
    %108 = vmatprep.subr.mxu0 0.0
    %109 = vmatpush1.msra.mxu0 0.0
    %110 = vmatprep.subr.mxu0 0.0
    %111 = vmatpush1.msra.mxu0 0.0
    %112 = vmatprep.subr.mxu0 0.0
    %113 = vmatpush1.msra.mxu0 0.0
    %114 = vmatprep.subr.mxu0 0.0
    %115 = vmatpush1.msra.mxu0 0.0
    %116 = vmatprep.subr.mxu0 0.0
    %117 = vmatpush1.msra.mxu0 0.0
    %118 = vmatprep.subr.mxu0 0.0
    %119 = vmatpush1.msra.mxu0 0.0
    %120 = vmatprep.subr.mxu0 0.0
    %121 = vmatpush1.msra.mxu0 0.0
    %122 = vmatprep.subr.mxu0 0.0
    %123 = vmatpush1.msra.mxu0 0.0
    %124 = vmatprep.subr.mxu0 0.0
    %125 = vmatpush1.msra.mxu0 0.0
    %126 = vmatprep.subr.mxu0 0.0
    %127 = vmatpush1.msra.mxu0 0.0
    %128 = vmatprep.subr.mxu0 0.0
    %129 = vmatpush1.msra.mxu0 0.0
    %130 = vmatprep.subr.mxu0 0.0
    %131 = vmatpush1.msra.mxu0 0.0
    %132 = vmatprep.subr.mxu0 0.0
    %133 = vmatpush1.msra.mxu0 0.0
    %134 = vmatprep.subr.mxu0 0.0
    %135 = vmatpush1.msra.mxu0 0.0
    %136 = vmatprep.subr.mxu0 0.0
    %137 = vmatpush1.msra.mxu0 0.0
    %138 = vmatprep.subr.mxu0 0.0
    %139 = vmatpush1.msra.mxu0 0.0
    %140 = vmatprep.mubr.f32.mxu0 0.0
    %141 = vmatmul.mubr.f32.gmra.mrb[0].mxu0 %v61
    %v142 = vpop.f32.mrb[0].mxu0
    %v143 = vadd.f32 %v42, %v142
    %v144 = vpop.f32.mrb[0].mxu0
    %145 = vmatprep.mubr.f32.mxu0 0.0
    %146 = vmatmul.mubr.f32.gmra.mrb[0].mxu0 %v64
    %v147 = vpop.f32.mrb[0].mxu0
    %v148 = vadd.f32 %v47, %v147
    %v149 = vpop.f32.mrb[0].mxu0
    %150 = vmatprep.mubr.f32.mxu0 0.0
    %151 = vmatmul.mubr.f32.gmra.mrb[0].mxu0 %v67
    %v152 = vpop.f32.mrb[0].mxu0
    %v153 = vadd.f32 %v52, %v152
    %v154 = vpop.f32.mrb[0].mxu0
    %155 = vmatprep.mubr.f32.mxu0 0.0
    %156 = vmatmul.mubr.f32.gmra.mrb[0].mxu0 %v70
    %v157 = vpop.f32.mrb[0].mxu0
    %v158 = vadd.f32 %v57, %v157
    %v159 = vpop.f32.mrb[0].mxu0
    %160 = vdwg.mxu0
    %v161 = vxor.u32 %v143, 2147483648
    %v162 = vxor.u32 %v148, 2147483648
    %v163 = vxor.u32 %v153, 2147483648
    %v164 = vxor.u32 %v158, 2147483648
    %v165 = vmul.f32 %v161, 1.442695
    %v166 = vpow.pop %v165
    %v167 = vmul.f32 %v162, 1.442695
    %v168 = vpow.pop %v167
    %v169 = vmul.f32 %v163, 1.442695
    %v170 = vpow.pop %v169
    %v171 = vmul.f32 %v164, 1.442695
    %v172 = vpow.pop %v171
    %v173 = vadd.f32 %v166, 1.0
    %v174 = vadd.f32 %v168, 1.0
    %v175 = vadd.f32 %v170, 1.0
    %v176 = vadd.f32 %v172, 1.0
    %v177 = vrcp.pop %v173
    %v178 = vmul.f32 1.0, %v177
    %v179 = vrcp.pop %v174
    %v180 = vmul.f32 1.0, %v179
    %v181 = vrcp.pop %v175
    %v182 = vmul.f32 1.0, %v181
    %v183 = vrcp.pop %v176
    %v184 = vmul.f32 1.0, %v183
    %v185 = vmul.f32 %v143, %v178
    %v186 = vmul.f32 %v148, %v180
    %v187 = vmul.f32 %v153, %v182
    %v188 = vmul.f32 %v158, %v184
    %v189 = vld [vmem:[%s3] sm:$0xff]
    %v190 = vld [vmem:[%s3 + $0x8] sm:$0xff]
    %v191 = vld [vmem:[%s3 + $0x10] sm:$0xff]
    %v192 = vld [vmem:[%s3 + $0x18] sm:$0xff]
    %v193 = vld [vmem:[%s4] sm:$0xff]
    %v194 = vld [vmem:[%s4 + $0x8] sm:$0xff]
    %v195 = vld [vmem:[%s4 + $0x10] sm:$0xff]
    %v196 = vld [vmem:[%s4 + $0x18] sm:$0xff]
    %198 = vset.pattern.permute.xlu0 0
    %199 = vperm.xlu0 %198, %v193
    %v200 = vpop.permute.xlu0 %199
    %203 = vset.pattern.permute.xlu0 0
    %204 = vperm.xlu0 %203, %v194
    %v205 = vpop.permute.xlu0 %204
    %208 = vset.pattern.permute.xlu0 0
    %209 = vperm.xlu0 %208, %v195
    %v210 = vpop.permute.xlu0 %209
    %213 = vset.pattern.permute.xlu0 0
    %214 = vperm.xlu0 %213, %v196
    %v215 = vpop.permute.xlu0 %214
    %vm217 = vcmask 261120
    %v219 = vsel %vm217, %v189, 0
    %v222 = vsel %vm217, %v190, 0
    %v225 = vsel %vm217, %v191, 0
    %v228 = vsel %vm217, %v192, 0
    %230 = vmatprep.subr.mxu0 0.0
    %231 = vmatpush1.msra.mxu0 %v185
    %232 = vmatprep.subr.mxu0 0.0
    %233 = vmatpush1.msra.mxu0 %v186
    %234 = vmatprep.subr.mxu0 0.0
    %235 = vmatpush1.msra.mxu0 %v187
    %236 = vmatprep.subr.mxu0 0.0
    %237 = vmatpush1.msra.mxu0 %v188
    %238 = vmatprep.subr.mxu0 0.0
    %239 = vmatpush1.msra.mxu0 0.0
    %240 = vmatprep.subr.mxu0 0.0
    %241 = vmatpush1.msra.mxu0 0.0
    %242 = vmatprep.subr.mxu0 0.0
    %243 = vmatpush1.msra.mxu0 0.0
    %244 = vmatprep.subr.mxu0 0.0
    %245 = vmatpush1.msra.mxu0 0.0
    %246 = vmatprep.subr.mxu0 0.0
    %247 = vmatpush1.msra.mxu0 0.0
    %248 = vmatprep.subr.mxu0 0.0
    %249 = vmatpush1.msra.mxu0 0.0
    %250 = vmatprep.subr.mxu0 0.0
    %251 = vmatpush1.msra.mxu0 0.0
    %252 = vmatprep.subr.mxu0 0.0
    %253 = vmatpush1.msra.mxu0 0.0
    %254 = vmatprep.subr.mxu0 0.0
    %255 = vmatpush1.msra.mxu0 0.0
    %256 = vmatprep.subr.mxu0 0.0
    %257 = vmatpush1.msra.mxu0 0.0
    %258 = vmatprep.subr.mxu0 0.0
    %259 = vmatpush1.msra.mxu0 0.0
    %260 = vmatprep.subr.mxu0 0.0
    %261 = vmatpush1.msra.mxu0 0.0
    %262 = vmatprep.subr.mxu0 0.0
    %263 = vmatpush1.msra.mxu0 0.0
    %264 = vmatprep.subr.mxu0 0.0
    %265 = vmatpush1.msra.mxu0 0.0
    %266 = vmatprep.subr.mxu0 0.0
    %267 = vmatpush1.msra.mxu0 0.0
    %268 = vmatprep.subr.mxu0 0.0
    %269 = vmatpush1.msra.mxu0 0.0
    %270 = vmatprep.subr.mxu0 0.0
    %271 = vmatpush1.msra.mxu0 0.0
    %272 = vmatprep.subr.mxu0 0.0
    %273 = vmatpush1.msra.mxu0 0.0
    %274 = vmatprep.subr.mxu0 0.0
    %275 = vmatpush1.msra.mxu0 0.0
    %276 = vmatprep.subr.mxu0 0.0
    %277 = vmatpush1.msra.mxu0 0.0
    %278 = vmatprep.subr.mxu0 0.0
    %279 = vmatpush1.msra.mxu0 0.0
    %280 = vmatprep.subr.mxu0 0.0
    %281 = vmatpush1.msra.mxu0 0.0
    %282 = vmatprep.subr.mxu0 0.0
    %283 = vmatpush1.msra.mxu0 0.0
    %284 = vmatprep.subr.mxu0 0.0
    %285 = vmatpush1.msra.mxu0 0.0
    %286 = vmatprep.subr.mxu0 0.0
    %287 = vmatpush1.msra.mxu0 0.0
    %288 = vmatprep.subr.mxu0 0.0
    %289 = vmatpush1.msra.mxu0 0.0
    %290 = vmatprep.subr.mxu0 0.0
    %291 = vmatpush1.msra.mxu0 0.0
    %292 = vmatprep.subr.mxu0 0.0
    %293 = vmatpush1.msra.mxu0 0.0
    %294 = vmatprep.mubr.f32.mxu0 0.0
    %295 = vmatmul.mubr.f32.gmra.mrb[0].mxu0 %v219
    %v296 = vpop.f32.mrb[0].mxu0
    %v297 = vadd.f32 %v200, %v296
    %v298 = vpop.f32.mrb[0].mxu0
    %299 = vmatprep.mubr.f32.mxu0 0.0
    %300 = vmatmul.mubr.f32.gmra.mrb[0].mxu0 %v222
    %v301 = vpop.f32.mrb[0].mxu0
    %v302 = vadd.f32 %v205, %v301
    %v303 = vpop.f32.mrb[0].mxu0
    %304 = vmatprep.mubr.f32.mxu0 0.0
    %305 = vmatmul.mubr.f32.gmra.mrb[0].mxu0 %v225
    %v306 = vpop.f32.mrb[0].mxu0
    %v307 = vadd.f32 %v210, %v306
    %v308 = vpop.f32.mrb[0].mxu0
    %309 = vmatprep.mubr.f32.mxu0 0.0
    %310 = vmatmul.mubr.f32.gmra.mrb[0].mxu0 %v228
    %v311 = vpop.f32.mrb[0].mxu0
    %v312 = vadd.f32 %v215, %v311
    %v313 = vpop.f32.mrb[0].mxu0
    %314 = vdwg.mxu0
    %v315 = vxor.u32 %v297, 2147483648
    %v316 = vxor.u32 %v302, 2147483648
    %v317 = vxor.u32 %v307, 2147483648
    %v318 = vxor.u32 %v312, 2147483648
    %v319 = vmul.f32 %v315, 1.442695
    %v320 = vpow.pop %v319
    %v321 = vmul.f32 %v316, 1.442695
    %v322 = vpow.pop %v321
    %v323 = vmul.f32 %v317, 1.442695
    %v324 = vpow.pop %v323
    %v325 = vmul.f32 %v318, 1.442695
    %v326 = vpow.pop %v325
    %v327 = vadd.f32 %v320, 1.0
    %v328 = vadd.f32 %v322, 1.0
    %v329 = vadd.f32 %v324, 1.0
    %v330 = vadd.f32 %v326, 1.0
    %v331 = vrcp.pop %v327
    %v332 = vmul.f32 1.0, %v331
    %v333 = vrcp.pop %v328
    %v334 = vmul.f32 1.0, %v333
    %v335 = vrcp.pop %v329
    %v336 = vmul.f32 1.0, %v335
    %v337 = vrcp.pop %v330
    %v338 = vmul.f32 1.0, %v337
    %v339 = vmul.f32 %v297, %v332
    %v340 = vmul.f32 %v302, %v334
    %v341 = vmul.f32 %v307, %v336
    %v342 = vmul.f32 %v312, %v338
    %v343 = vld [vmem:[%s5] sm:$0x1]
    %v344 = vld [vmem:[#allocation2] sm:$0x1]
    %346 = vset.pattern.permute.xlu0 0
    %347 = vperm.xlu0 %346, %v344
    %v348 = vpop.permute.xlu0 %347
    %v350 = vlaneseq
    %v351 = vshrl.u32 %v350, 7
    %v352 = vsub.s32 0, %v351
    %v353 = vrot.slane %v348, %v352
    %v355 = vsel %vm217, %v343, 0
    %357 = vmatprep.subr.mxu0 0.0
    %358 = vmatpush1.msra.mxu0 %v339
    %359 = vmatprep.subr.mxu0 0.0
    %360 = vmatpush1.msra.mxu0 %v340
    %361 = vmatprep.subr.mxu0 0.0
    %362 = vmatpush1.msra.mxu0 %v341
    %363 = vmatprep.subr.mxu0 0.0
    %364 = vmatpush1.msra.mxu0 %v342
    %365 = vmatprep.subr.mxu0 0.0
    %366 = vmatpush1.msra.mxu0 0.0
    %367 = vmatprep.subr.mxu0 0.0
    %368 = vmatpush1.msra.mxu0 0.0
    %369 = vmatprep.subr.mxu0 0.0
    %370 = vmatpush1.msra.mxu0 0.0
    %371 = vmatprep.subr.mxu0 0.0
    %372 = vmatpush1.msra.mxu0 0.0
    %373 = vmatprep.subr.mxu0 0.0
    %374 = vmatpush1.msra.mxu0 0.0
    %375 = vmatprep.subr.mxu0 0.0
    %376 = vmatpush1.msra.mxu0 0.0
    %377 = vmatprep.subr.mxu0 0.0
    %378 = vmatpush1.msra.mxu0 0.0
    %379 = vmatprep.subr.mxu0 0.0
    %380 = vmatpush1.msra.mxu0 0.0
    %381 = vmatprep.subr.mxu0 0.0
    %382 = vmatpush1.msra.mxu0 0.0
    %383 = vmatprep.subr.mxu0 0.0
    %384 = vmatpush1.msra.mxu0 0.0
    %385 = vmatprep.subr.mxu0 0.0
    %386 = vmatpush1.msra.mxu0 0.0
    %387 = vmatprep.subr.mxu0 0.0
    %388 = vmatpush1.msra.mxu0 0.0
    %389 = vmatprep.subr.mxu0 0.0
    %390 = vmatpush1.msra.mxu0 0.0
    %391 = vmatprep.subr.mxu0 0.0
    %392 = vmatpush1.msra.mxu0 0.0
    %393 = vmatprep.subr.mxu0 0.0
    %394 = vmatpush1.msra.mxu0 0.0
    %395 = vmatprep.subr.mxu0 0.0
    %396 = vmatpush1.msra.mxu0 0.0
    %397 = vmatprep.subr.mxu0 0.0
    %398 = vmatpush1.msra.mxu0 0.0
    %399 = vmatprep.subr.mxu0 0.0
    %400 = vmatpush1.msra.mxu0 0.0
    %401 = vmatprep.subr.mxu0 0.0
    %402 = vmatpush1.msra.mxu0 0.0
    %403 = vmatprep.subr.mxu0 0.0
    %404 = vmatpush1.msra.mxu0 0.0
    %405 = vmatprep.subr.mxu0 0.0
    %406 = vmatpush1.msra.mxu0 0.0
    %407 = vmatprep.subr.mxu0 0.0
    %408 = vmatpush1.msra.mxu0 0.0
    %409 = vmatprep.subr.mxu0 0.0
    %410 = vmatpush1.msra.mxu0 0.0
    %411 = vmatprep.subr.mxu0 0.0
    %412 = vmatpush1.msra.mxu0 0.0
    %413 = vmatprep.subr.mxu0 0.0
    %414 = vmatpush1.msra.mxu0 0.0
    %415 = vmatprep.subr.mxu0 0.0
    %416 = vmatpush1.msra.mxu0 0.0
    %417 = vmatprep.subr.mxu0 0.0
    %418 = vmatpush1.msra.mxu0 0.0
    %419 = vmatprep.subr.mxu0 0.0
    %420 = vmatpush1.msra.mxu0 0.0
    %421 = vmatprep.mubr.f32.mxu0 0.0
    %422 = vmatmul.mubr.f32.gmra.mrb[0].mxu0 %v355
    %v423 = vpop.f32.mrb[0].mxu0
    %v424 = vadd.f32 %v353, %v423
    %v425 = vpop.f32.mrb[0].mxu0
    %426 = vdwg.mxu0
    %427 = vst [vmem:[#allocation3] sm:$0x1] %v424
    // Predicated region
    $region30: #{tpu_custom_call.1} parent=1 // pred_check
      _
    $region31: #{tpu_custom_call.1} parent=1 // pred_check_branch
      %429 = sbr.rel (0) target = $region33
    $region32: #{tpu_custom_call.1} parent=1 // pred_region
      %s431 = ssub.s32 16, 16
      %432 = vsyncadd [#allocation4], %s431
      %s434 = sshll.u32 [#allocation3], 4
      %s435 = int_to_ptr.vmem [resolvable:$true] %s434
      %437 = dma.vmem_to_hbm [thread:$0]  %s435, 16, %s7, [#allocation4]
    $region33: #{tpu_custom_call.1} parent=1 // pred_fallthru
      _
    // Predicated region
    $region34: #{tpu_custom_call.1} parent=1 // pred_check
      _
    $region35: #{tpu_custom_call.1} parent=1 // pred_check_branch
      %439 = sbr.rel (0) target = $region37
    $region36: #{tpu_custom_call.1} parent=1 // pred_region
      %440 = dma.done [#allocation4], 16
    $region37: #{tpu_custom_call.1} parent=1 // pred_fallthru
      _
    %441 = vsyncpa [#allocation4], 1

</llo_original>
